<compile_context>
chip_gen: v7x
topology: tpu7x:2x2x1
jax: 0.10.0
libtpu: 0.0.40
codegen_flags: <defaults>
</compile_context>

<pallas_src>
import jax
import jax.numpy as jnp
from jax.experimental import pallas as pl
from jax.experimental.pallas import tpu as pltpu


_INV255 = 1.0 / 255.0


def _make_pre_kernel(a, b):
    a = float(a)
    b = float(b)

    def pre_kernel(scales_ref, x_ref, out_ref):
        # scales_ref: (3,) float32 in SMEM  (k/mean per stored channel)
        # x_ref:      (3, block_h, W) uint8
        # out_ref:    (12, block_h, W) float32
        x = x_ref[...].astype(jnp.float32)          # (3, bh, W)
        xn = x * _INV255                             # reused below

        # ---- passthrough image (ToTensor: /255) ----
        out_ref[0:3, :, :] = xn

        # ---- gray-world white balance ----
        # cv.addWeighted: round + saturate to [0, 255]; cv.merge([b, g, r])
        # reverses the channel order relative to cv.split.  Each per-channel
        # slab x[c] is a dense (block_h, W) tile (full sublane utilization).
        s0 = scales_ref[0]
        s1 = scales_ref[1]
        s2 = scales_ref[2]
        out_ref[3, :, :] = jnp.clip(jnp.round(x[2] * s2), 0.0, 255.0) * _INV255
        out_ref[4, :, :] = jnp.clip(jnp.round(x[1] * s1), 0.0, 255.0) * _INV255
        out_ref[5, :, :] = jnp.clip(jnp.round(x[0] * s0), 0.0, 255.0) * _INV255

        # ---- brightness: a*x + b, clamp top at 255, np.round ----
        y = a * x + b
        out_ref[6:9, :, :] = jnp.round(jnp.where(y > 255.0, 255.0, y)) * _INV255

        # ---- gamma: floor((x/255)^2.5 * 255)  (uint8 cast == truncation) ----
        out_ref[9:12, :, :] = jnp.floor(xn * xn * jnp.sqrt(xn) * 255.0) * _INV255

    return pre_kernel


def _choose_block_h(H, W):
    """Rows per grid step: ~64K elements/step (~3.3 MB in+out), multiple of 8
    (or full H), and >= 2 grid steps when H allows (v7x megacore)."""
    TARGET_ELEMS = 64 * 1024
    rows = max(8, (TARGET_ELEMS // max(W, 1)) // 8 * 8)
    block_h = min(rows, H)
    if H >= 16:
        half = -(-H // 2)              # ceil(H / 2)
        half = -(-half // 8) * 8       # round up to a multiple of 8
        block_h = min(block_h, half)   # keep at least 2 grid steps
    if block_h < H and block_h % 8 != 0:
        block_h = max(8, (block_h // 8) * 8)
    return block_h


def pre_forward(img_hwc, a, b):
    """img_hwc: (H, W, 3) uint8 image. Returns (1, 12, H, W) float32 in [0,1]."""
    H, W, C = img_hwc.shape
    assert C == 3, "expect a 3-channel (cv2-style) image"
    a = float(a)
    b = float(b)
    # Brightness path matches the NumPy reference only for a > 0, b >= 0
    # (otherwise the reference has uint8 wrap-around semantics).
    assert a > 0.0 and b >= 0.0, "pre: expects a > 0 and b >= 0"

    N = H * W

    # ---- layout glue: ToTensor transpose, kept in uint8 ----
    # TODO(synk): fuse this HWC->CHW uint8 de-interleave (and the channel sums
    # below) into a small Pallas pre-pass if the XLA relayout doesn't run at
    # copy bandwidth on large images.
    x_chw = jnp.transpose(img_hwc, (2, 0, 1))                    # (3, H, W) u8

    # ---- gray-world per-channel means (exact integer sums, tiny XLA op) ----
    # NOTE: like the OpenCV reference, an all-zero channel would give inf.
    # uint32 sums are exact for images up to ~16.8 Mpix.
    sums = jnp.sum(x_chw.astype(jnp.uint32), axis=(1, 2))        # (3,)
    means = sums.astype(jnp.float32) / jnp.float32(N)
    k = jnp.mean(means)
    scales = (k / means).astype(jnp.float32)                     # (3,)

    # ---- tiling over rows ----
    block_h = _choose_block_h(H, W)
    grid_h = pl.cdiv(H, block_h)

    # Double-buffered in+out footprint (+ slack for u8/lane padding & scratch).
    vmem_need = 2 * block_h * W * (3 * 1 + 12 * 4) + (2 << 20)
    vmem_limit = int(min(max(vmem_need, 16 << 20), 40 << 20))

    cost = pl.CostEstimate(
        flops=45 * N,               # ~15 VPU ops per channel-pixel
        transcendentals=3 * N,      # sqrt in the gamma path
        bytes_accessed=3 * N + 48 * N + 12,
    )

    out = pl.pallas_call(
        _make_pre_kernel(a, b),
        out_shape=jax.ShapeDtypeStruct((12, H, W), jnp.float32),
        grid=(grid_h,),
        in_specs=[
            pl.BlockSpec(memory_space=pltpu.MemorySpace.SMEM),       # scales (3,)
            pl.BlockSpec((3, block_h, W), lambda i: (0, i, 0)),      # uint8 CHW
        ],
        out_specs=pl.BlockSpec((12, block_h, W), lambda i: (0, i, 0)),
        compiler_params=pltpu.CompilerParams(
            dimension_semantics=("parallel",),
            vmem_limit_bytes=vmem_limit,
        ),
        cost_estimate=cost,
    )(scales, x_chw)

    # hazef.expand(1, 12, H, W) — pure view / broadcast, plain JAX glue.
    return out[None, :, :, :]


def pre_reference(img_hwc, a, b):
    """Pure-JAX reference mirroring the torch/NumPy/OpenCV semantics."""
    H, W, _ = img_hwc.shape
    x = jnp.transpose(img_hwc, (2, 0, 1)).astype(jnp.float32)    # (3, H, W)
    y = float(a) * x + float(b)
    bright = jnp.round(jnp.where(y > 255.0, 255.0, y))
    xn = x * _INV255
    gamma = jnp.floor(xn * xn * jnp.sqrt(xn) * 255.0)
    sums = jnp.sum(img_hwc.astype(jnp.uint32), axis=(0, 1))
    means = sums.astype(jnp.float32) / jnp.float32(H * W)
    k = jnp.mean(means)
    s = k / means
    bal = jnp.clip(jnp.round(x * s[:, None, None]), 0.0, 255.0)[::-1]
    out = jnp.concatenate([x, bal, bright, gamma], axis=0) * _INV255
    return out[None]


if __name__ == "__main__":
    # Deterministic module "parameters" (pre.__init__(a, b))
    A, B = 1.2, 10.0

    key = jax.random.PRNGKey(0)
    # Two small HWC uint8 images: a lane-friendly one (grid splits into 2
    # steps) and an awkward one (odd H -> masked tail block, W < 128 lanes).
    for (H, W) in [(64, 96), (33, 48)]:
        key, sub = jax.random.split(key)
        img = jax.random.randint(sub, (H, W, 3), 0, 256, dtype=jnp.int32).astype(
            jnp.uint8
        )

        out = pre_forward(img, A, B)
        out = jax.block_until_ready(out)

        assert out.shape == (1, 12, H, W), out.shape
        assert out.dtype == jnp.float32
        assert bool(jnp.all(jnp.isfinite(out)))

        ref = pre_reference(img, A, B)
        max_err = float(jnp.max(jnp.abs(out - ref)))
        # Allow a single 1/255 LSB flip (floor/round boundary ulp differences).
        assert max_err <= 5e-3, f"({H},{W}) max abs error {max_err}"

    print("KERNEL_OK")
</pallas_src>

<mosaic_0001>
module attributes {stable_mosaic.version = 11 : i64} {
  func.func @pre_kernel(%arg0: i32, %arg1: memref<3xf32, #tpu.memory_space<smem>>, %arg2: memref<3x32x96xi8, #tpu.memory_space<vmem>>, %arg3: memref<12x32x96xf32, #tpu.memory_space<vmem>>) attributes {dimension_semantics = [#tpu.dimension_semantics<parallel>], iteration_bounds = array<i64: 2>, scalar_prefetch = 0 : i64, scratch_operands = 0 : i64, tpu.core_type = #tpu.core_type<tc>, window_params = [{transform_indices = @transform_0, window_bounds = array<i64: 3>}, {transform_indices = @transform_1, window_bounds = array<i64: 3, 32, 96>}, {transform_indices = @transform_2, window_bounds = array<i64: 12, 32, 96>}]} {
    %c0 = arith.constant 0 : index
    %c0_0 = arith.constant 0 : index
    %c0_1 = arith.constant 0 : index
    %0 = vector.load %arg2[%c0, %c0_0, %c0_1] : memref<3x32x96xi8, #tpu.memory_space<vmem>>, vector<3x32x96xi8>
    %1 = arith.uitofp %0 : vector<3x32x96xi8> to vector<3x32x96xf32>
    %cst = arith.constant 0.00392156886 : f32
    %2 = vector.broadcast %cst : f32 to vector<3x32x96xf32>
    %3 = arith.mulf %1, %2 : vector<3x32x96xf32>
    %c0_2 = arith.constant 0 : index
    %c0_3 = arith.constant 0 : index
    %c0_4 = arith.constant 0 : index
    %4 = vector.load %arg3[%c0_2, %c0_3, %c0_4] : memref<12x32x96xf32, #tpu.memory_space<vmem>>, vector<3x32x96xf32>
    tpu.vector_store %arg3[%c0_2, %c0_3, %c0_4], %3 {strides = array<i32>} : memref<12x32x96xf32, #tpu.memory_space<vmem>>, vector<3x32x96xf32>,
    %c0_5 = arith.constant 0 : index
    %5 = memref.load %arg1[%c0_5] : memref<3xf32, #tpu.memory_space<smem>>
    %c1 = arith.constant 1 : index
    %6 = memref.load %arg1[%c1] : memref<3xf32, #tpu.memory_space<smem>>
    %c2 = arith.constant 2 : index
    %7 = memref.load %arg1[%c2] : memref<3xf32, #tpu.memory_space<smem>>
    %8 = vector.extract_strided_slice %1 {offsets = [2, 0, 0], sizes = [1, 32, 96], strides = [1, 1, 1]} : vector<3x32x96xf32> to vector<1x32x96xf32>
    %9 = vector.shape_cast %8 : vector<1x32x96xf32> to vector<32x96xf32>
    %10 = vector.broadcast %7 : f32 to vector<32x96xf32>
    %11 = arith.mulf %9, %10 : vector<32x96xf32>
    %12 = math.roundeven %11 : vector<32x96xf32>
    %cst_6 = arith.constant 0.000000e+00 : f32
    %cst_7 = arith.constant 2.550000e+02 : f32
    %13 = vector.broadcast %cst_6 : f32 to vector<32x96xf32>
    %14 = arith.maximumf %13, %12 : vector<32x96xf32>
    %15 = vector.broadcast %cst_7 : f32 to vector<32x96xf32>
    %16 = arith.minimumf %15, %14 : vector<32x96xf32>
    %cst_8 = arith.constant 0.00392156886 : f32
    %17 = vector.broadcast %cst_8 : f32 to vector<32x96xf32>
    %18 = arith.mulf %16, %17 : vector<32x96xf32>
    %c3 = arith.constant 3 : index
    %c0_9 = arith.constant 0 : index
    %c0_10 = arith.constant 0 : index
    %19 = vector.load %arg3[%c3, %c0_9, %c0_10] : memref<12x32x96xf32, #tpu.memory_space<vmem>>, vector<1x32x96xf32>
    %20 = vector.shape_cast %19 : vector<1x32x96xf32> to vector<32x96xf32>
    %21 = vector.shape_cast %18 : vector<32x96xf32> to vector<1x32x96xf32>
    tpu.vector_store %arg3[%c3, %c0_9, %c0_10], %21 {strides = array<i32>} : memref<12x32x96xf32, #tpu.memory_space<vmem>>, vector<1x32x96xf32>,
    %22 = vector.extract_strided_slice %1 {offsets = [1, 0, 0], sizes = [1, 32, 96], strides = [1, 1, 1]} : vector<3x32x96xf32> to vector<1x32x96xf32>
    %23 = vector.shape_cast %22 : vector<1x32x96xf32> to vector<32x96xf32>
    %24 = vector.broadcast %6 : f32 to vector<32x96xf32>
    %25 = arith.mulf %23, %24 : vector<32x96xf32>
    %26 = math.roundeven %25 : vector<32x96xf32>
    %cst_11 = arith.constant 0.000000e+00 : f32
    %cst_12 = arith.constant 2.550000e+02 : f32
    %27 = vector.broadcast %cst_11 : f32 to vector<32x96xf32>
    %28 = arith.maximumf %27, %26 : vector<32x96xf32>
    %29 = vector.broadcast %cst_12 : f32 to vector<32x96xf32>
    %30 = arith.minimumf %29, %28 : vector<32x96xf32>
    %cst_13 = arith.constant 0.00392156886 : f32
    %31 = vector.broadcast %cst_13 : f32 to vector<32x96xf32>
    %32 = arith.mulf %30, %31 : vector<32x96xf32>
    %c4 = arith.constant 4 : index
    %c0_14 = arith.constant 0 : index
    %c0_15 = arith.constant 0 : index
    %33 = vector.load %arg3[%c4, %c0_14, %c0_15] : memref<12x32x96xf32, #tpu.memory_space<vmem>>, vector<1x32x96xf32>
    %34 = vector.shape_cast %33 : vector<1x32x96xf32> to vector<32x96xf32>
    %35 = vector.shape_cast %32 : vector<32x96xf32> to vector<1x32x96xf32>
    tpu.vector_store %arg3[%c4, %c0_14, %c0_15], %35 {strides = array<i32>} : memref<12x32x96xf32, #tpu.memory_space<vmem>>, vector<1x32x96xf32>,
    %36 = vector.extract_strided_slice %1 {offsets = [0, 0, 0], sizes = [1, 32, 96], strides = [1, 1, 1]} : vector<3x32x96xf32> to vector<1x32x96xf32>
    %37 = vector.shape_cast %36 : vector<1x32x96xf32> to vector<32x96xf32>
    %38 = vector.broadcast %5 : f32 to vector<32x96xf32>
    %39 = arith.mulf %37, %38 : vector<32x96xf32>
    %40 = math.roundeven %39 : vector<32x96xf32>
    %cst_16 = arith.constant 0.000000e+00 : f32
    %cst_17 = arith.constant 2.550000e+02 : f32
    %41 = vector.broadcast %cst_16 : f32 to vector<32x96xf32>
    %42 = arith.maximumf %41, %40 : vector<32x96xf32>
    %43 = vector.broadcast %cst_17 : f32 to vector<32x96xf32>
    %44 = arith.minimumf %43, %42 : vector<32x96xf32>
    %cst_18 = arith.constant 0.00392156886 : f32
    %45 = vector.broadcast %cst_18 : f32 to vector<32x96xf32>
    %46 = arith.mulf %44, %45 : vector<32x96xf32>
    %c5 = arith.constant 5 : index
    %c0_19 = arith.constant 0 : index
    %c0_20 = arith.constant 0 : index
    %47 = vector.load %arg3[%c5, %c0_19, %c0_20] : memref<12x32x96xf32, #tpu.memory_space<vmem>>, vector<1x32x96xf32>
    %48 = vector.shape_cast %47 : vector<1x32x96xf32> to vector<32x96xf32>
    %49 = vector.shape_cast %46 : vector<32x96xf32> to vector<1x32x96xf32>
    tpu.vector_store %arg3[%c5, %c0_19, %c0_20], %49 {strides = array<i32>} : memref<12x32x96xf32, #tpu.memory_space<vmem>>, vector<1x32x96xf32>,
    %cst_21 = arith.constant 1.200000e+00 : f32
    %50 = vector.broadcast %cst_21 : f32 to vector<3x32x96xf32>
    %51 = arith.mulf %50, %1 : vector<3x32x96xf32>
    %cst_22 = arith.constant 1.000000e+01 : f32
    %52 = vector.broadcast %cst_22 : f32 to vector<3x32x96xf32>
    %53 = arith.addf %51, %52 : vector<3x32x96xf32>
    %cst_23 = arith.constant 2.550000e+02 : f32
    %54 = vector.broadcast %cst_23 : f32 to vector<3x32x96xf32>
    %55 = arith.cmpf ogt, %53, %54 : vector<3x32x96xf32>
    %cst_24 = arith.constant 2.550000e+02 : f32
    %56 = vector.broadcast %cst_24 : f32 to vector<3x32x96xf32>
    %57 = arith.select %55, %56, %53 : vector<3x32x96xi1>, vector<3x32x96xf32>
    %58 = math.roundeven %57 : vector<3x32x96xf32>
    %cst_25 = arith.constant 0.00392156886 : f32
    %59 = vector.broadcast %cst_25 : f32 to vector<3x32x96xf32>
    %60 = arith.mulf %58, %59 : vector<3x32x96xf32>
    %c6 = arith.constant 6 : index
    %c0_26 = arith.constant 0 : index
    %c0_27 = arith.constant 0 : index
    %61 = vector.load %arg3[%c6, %c0_26, %c0_27] : memref<12x32x96xf32, #tpu.memory_space<vmem>>, vector<3x32x96xf32>
    tpu.vector_store %arg3[%c6, %c0_26, %c0_27], %60 {strides = array<i32>} : memref<12x32x96xf32, #tpu.memory_space<vmem>>, vector<3x32x96xf32>,
    %62 = arith.mulf %3, %3 : vector<3x32x96xf32>
    %63 = math.sqrt %3 : vector<3x32x96xf32>
    %64 = arith.mulf %62, %63 : vector<3x32x96xf32>
    %cst_28 = arith.constant 2.550000e+02 : f32
    %65 = vector.broadcast %cst_28 : f32 to vector<3x32x96xf32>
    %66 = arith.mulf %64, %65 : vector<3x32x96xf32>
    %67 = math.floor %66 : vector<3x32x96xf32>
    %cst_29 = arith.constant 0.00392156886 : f32
    %68 = vector.broadcast %cst_29 : f32 to vector<3x32x96xf32>
    %69 = arith.mulf %67, %68 : vector<3x32x96xf32>
    %c9 = arith.constant 9 : index
    %c0_30 = arith.constant 0 : index
    %c0_31 = arith.constant 0 : index
    %70 = vector.load %arg3[%c9, %c0_30, %c0_31] : memref<12x32x96xf32, #tpu.memory_space<vmem>>, vector<3x32x96xf32>
    tpu.vector_store %arg3[%c9, %c0_30, %c0_31], %69 {strides = array<i32>} : memref<12x32x96xf32, #tpu.memory_space<vmem>>, vector<3x32x96xf32>,
    return
  }
  func.func @transform_0(%arg0: i32) -> i32 {
    %c0_i32 = arith.constant 0 : i32
    %c0_i32_0 = arith.constant 0 : i32
    return %c0_i32 : i32
  }
  func.func @transform_1(%arg0: i32) -> (i32, i32, i32) {
    %c0_i32 = arith.constant 0 : i32
    %c0_i32_0 = arith.constant 0 : i32
    %c0_i32_1 = arith.constant 0 : i32
    return %c0_i32, %arg0, %c0_i32_0 : i32, i32, i32
  }
  func.func @transform_2(%arg0: i32) -> (i32, i32, i32) {
    %c0_i32 = arith.constant 0 : i32
    %c0_i32_0 = arith.constant 0 : i32
    %c0_i32_1 = arith.constant 0 : i32
    return %c0_i32, %arg0, %c0_i32_0 : i32, i32, i32
  }
}

</mosaic_0001>

<llo_original>
// kernel: tpu_custom_call.1
$region0: #{tpu_custom_call.1}
  #allocation0 [shape = 'u32[]', space=smem, size = 0x4, offset = 0x4, fixed_abs, tag = 'smem constant byte address 0x4 - core index']
  #allocation1 [shape = 'u32[144,128]{1,0:T(1,128)}', space=vmem, size = 0x12000, scoped, tag = 'internal scratch']
  #allocation8 [shape = 's32[]', space=sflag, size = 0x4, offset = 0, fixed_abs, tag = 'sflag constant byte address 0x0 - dummy sync flag']
  %s0 = inlined_call_operand.hbm [shape: f32[3], index: 0, kind: input, shape index: {}]
  %s1 = inlined_call_operand.hbm [shape: u8[3,64,96], index: 1, kind: input, shape index: {}]
  %s2 = inlined_call_operand.hbm [shape: f32[12,64,96], index: 2, kind: output, shape index: {}]
  %s3 = sld [smem:[#allocation0]]
  $region49: #{tpu_custom_call.1} parent=0
    _
  %s5 = ssub.s32 1, %s3
  %s6 = scalar_select 0, %s5, %s3
  $region1: #{tpu_custom_call.1} parent=0
    #allocation2 [shape = 'u8[512]{0}', space=smem, size = 0x200, scoped, tag = 'input window, operand 0, single buffered']
    #allocation3 [shape = 's32[2]{0}', space=sflag, size = 0x8, scoped, tag = 'scoped memory for tpu_custom_call.1']
    #allocation4 [shape = 's32[2]{0}', space=sflag, size = 0x8, scoped, tag = 'scoped memory for tpu_custom_call.1']
    #allocation5 [shape = 's32[2]{0}', space=sflag, size = 0x8, scoped, tag = 'scoped memory for tpu_custom_call.1']
    #allocation6 [shape = 'u8[24576]{0}', space=vmem, size = 0x6000, scoped, tag = 'input window, operand 1']
    #allocation7 [shape = 'u8[393216]{0}', space=vmem, size = 0x60000, scoped, tag = 'output window, operand 0']
    %7 = vsyncpa [#allocation5], 0
    %8 = vsyncpa [#allocation3], 0
    %s9 = scalar_lea.sflag [#allocation3], 1
    %10 = vsyncpa %s9, 0
    %11 = vsyncpa [#allocation4], 0
    %s12 = scalar_lea.sflag [#allocation4], 1
    %13 = vsyncpa %s12, 0
    loop: start=0, step=1, limit=4
    $region2: #{tpu_custom_call.1} parent=1 // loop_pre_header
      _
    $region3: #{tpu_custom_call.1} parent=1 // loop_header
      %s15 = sphi 0, %s19
      %p16 = scmp.ge.s32.totalorder %s15, 4
      %s23 = sphi 0, %s23
      %s25 = sphi 0, %s23
      %s26 = sphi 0, %s25
      %s40 = sphi 0, %s26
      %s46 = sphi 0, %s48
      %s49 = sphi 0, %s46
      %s50 = sphi 0, %s49
      %s66 = sphi 0, %s50
      %s72 = sphi 0, %s74
      %s75 = sphi 0, %s72
      %s76 = sphi 0, %s75
      %s92 = sphi 0, %s76
    $region4: #{tpu_custom_call.1} parent=1 // loop_header_branch
      %18 = sbr.rel (%p16) target = $region8
    $region5: #{tpu_custom_call.1} parent=1 // loop_body
      %s20 = ssub.s32 %s15, 1
      %s21 = ssub.s32 %s15, 2
      %s22 = sadd.s32 %s15, 1
      %s24 = sadd.s32 %s23, 1
      %p27 = scmp.eq.s32.totalorder %s15, 1
      %p28 = scmp.ne.s32.totalorder %s23, %s25
      %p29 = scmp.eq.s32.totalorder %s15, 0
      %p30 = por %p28, %p29
      %p31 = scmp.ne.s32.totalorder %s23, %s25
      %p32 = scmp.eq.s32.totalorder %s20, 1
      %p33 = por %p31, %p32
      %p34 = scmp.ne.s32.totalorder %s25, %s26
      %p35 = scmp.eq.s32.totalorder %s20, 0
      %p36 = por %p34, %p35
      %p37 = scmp.ne.s32.totalorder %s25, %s26
      %p38 = scmp.eq.s32.totalorder %s21, 1
      %p39 = por %p37, %p38
      %p41 = scmp.ne.s32.totalorder %s26, %s40
      %p42 = scmp.eq.s32.totalorder %s21, 0
      %p43 = por %p41, %p42
      %s44 = ssub.s32 %s15, %s22
      %p45 = scmp.eq.s32.totalorder %s44, 0
      %s47 = sadd.s32 %s46, 1
      %s48 = scalar_select %p45, %s46, %s47
      %p51 = pneg %p45
      %p52 = scmp.eq.s32.totalorder %s15, 1
      %p53 = por %p51, %p52
      %p54 = scmp.ne.s32.totalorder %s46, %s49
      %p55 = scmp.eq.s32.totalorder %s15, 0
      %p56 = por %p54, %p55
      %p57 = scmp.ne.s32.totalorder %s46, %s49
      %p58 = scmp.eq.s32.totalorder %s20, 1
      %p59 = por %p57, %p58
      %p60 = scmp.ne.s32.totalorder %s49, %s50
      %p61 = scmp.eq.s32.totalorder %s20, 0
      %p62 = por %p60, %p61
      %p63 = scmp.ne.s32.totalorder %s49, %s50
      %p64 = scmp.eq.s32.totalorder %s21, 1
      %p65 = por %p63, %p64
      %p67 = scmp.ne.s32.totalorder %s50, %s66
      %p68 = scmp.eq.s32.totalorder %s21, 0
      %p69 = por %p67, %p68
      %s70 = ssub.s32 %s15, %s22
      %p71 = scmp.eq.s32.totalorder %s70, 0
      %s73 = sadd.s32 %s72, 1
      %s74 = scalar_select %p71, %s72, %s73
      %p77 = pneg %p71
      %p78 = scmp.eq.s32.totalorder %s15, 1
      %p79 = por %p77, %p78
      %p80 = scmp.ne.s32.totalorder %s72, %s75
      %p81 = scmp.eq.s32.totalorder %s15, 0
      %p82 = por %p80, %p81
      %p83 = scmp.ne.s32.totalorder %s72, %s75
      %p84 = scmp.eq.s32.totalorder %s20, 1
      %p85 = por %p83, %p84
      %p86 = scmp.ne.s32.totalorder %s75, %s76
      %p87 = scmp.eq.s32.totalorder %s20, 0
      %p88 = por %p86, %p87
      %p89 = scmp.ne.s32.totalorder %s75, %s76
      %p90 = scmp.eq.s32.totalorder %s21, 1
      %p91 = por %p89, %p90
      %p93 = scmp.ne.s32.totalorder %s76, %s92
      %p94 = scmp.eq.s32.totalorder %s21, 0
      %p95 = por %p93, %p94
      %p96 = scmp.le.s32.totalorder 1, %s15
      %p97 = scmp.lt.s32.totalorder %s15, 3
      %p98 = pnand %p96, %p97
      %p99 = pneg %p98
      // Predicated region
      $region9: #{tpu_custom_call.1} parent=5 // pred_check
        _
      $region10: #{tpu_custom_call.1} parent=5 // pred_check_branch
        %101 = sbr.rel (%p98) target = $region12
      $region11: #{tpu_custom_call.1} parent=5 // pred_region
        %s102 = ssub.s32 %s15, 1
        // Predicated region
        $region13: #{tpu_custom_call.1} parent=11 // pred_check
          %p103 = pneg %p36
        $region14: #{tpu_custom_call.1} parent=11 // pred_check_branch
          %105 = sbr.rel (%p103) target = $region16
        $region15: #{tpu_custom_call.1} parent=11 // pred_region
          %s107 = ssub.s32 16, 16
          %108 = vsyncadd [#allocation5], %s107
          %111 = dma.hbm_to_smem %s0, 16, [#allocation2], [#allocation5]
        $region16: #{tpu_custom_call.1} parent=11 // pred_fallthru
          _
      $region12: #{tpu_custom_call.1} parent=5 // pred_fallthru
        _
      %p112 = scmp.lt.s32.totalorder %s15, 2
      // Predicated region
      $region17: #{tpu_custom_call.1} parent=5 // pred_check
        %p113 = pneg %p112
      $region18: #{tpu_custom_call.1} parent=5 // pred_check_branch
        %115 = sbr.rel (%p113) target = $region20
      $region19: #{tpu_custom_call.1} parent=5 // pred_region
        // Predicated region
        $region21: #{tpu_custom_call.1} parent=19 // pred_check
          %p116 = pneg %p56
        $region22: #{tpu_custom_call.1} parent=19 // pred_check_branch
          %118 = sbr.rel (%p116) target = $region24
        $region23: #{tpu_custom_call.1} parent=19 // pred_region
          %s119 = sand.u32 %s46, 1
          %s120 = scalar_lea.sflag [#allocation3], %s119
          %s121 = sand.u32 %s46, 1
          %s122 = smul.addr %s121, 24
          %s123 = scalar_lea.vmem [#allocation6], %s122
          %s125 = ssub.s32 384, 384
          %126 = vsyncadd %s120, %s125
          %s127 = smul.addr %s15, 128
          %s128 = scalar_lea.hbm %s1, %s127
          %s129 = sshll.u32 %s123, 4
          %s130 = int_to_ptr.vmem [resolvable:$true] %s129
          %135 = dma.hbm_to_vmem [thread:$0]  %s128, 384, %s130, %s120, 256, 128, 8
        $region24: #{tpu_custom_call.1} parent=19 // pred_fallthru
          _
      $region20: #{tpu_custom_call.1} parent=5 // pred_fallthru
        _
      %p136 = scmp.le.s32.totalorder 1, %s15
      %p137 = scmp.lt.s32.totalorder %s15, 3
      %p138 = pnand %p136, %p137
      %p139 = pneg %p138
      // Predicated region
      $region25: #{tpu_custom_call.1} parent=5 // pred_check
        _
      $region26: #{tpu_custom_call.1} parent=5 // pred_check_branch
        %141 = sbr.rel (%p138) target = $region28
      $region27: #{tpu_custom_call.1} parent=5 // pred_region
        %s142 = ssub.s32 %s15, 1
        // Predicated region
        $region29: #{tpu_custom_call.1} parent=27 // pred_check
          %p143 = pneg %p36
        $region30: #{tpu_custom_call.1} parent=27 // pred_check_branch
          %145 = sbr.rel (%p143) target = $region32
        $region31: #{tpu_custom_call.1} parent=27 // pred_region
          %146 = dma.done [#allocation5], 16
        $region32: #{tpu_custom_call.1} parent=27 // pred_fallthru
          _
        %s147 = sand.u32 %s49, 1
        %s148 = scalar_lea.sflag [#allocation3], %s147
        %s149 = sand.u32 %s49, 1
        %s150 = smul.addr %s149, 24
        %s151 = scalar_lea.vmem [#allocation6], %s150
        // Predicated region
        $region33: #{tpu_custom_call.1} parent=27 // pred_check
          %p152 = pneg %p62
        $region34: #{tpu_custom_call.1} parent=27 // pred_check_branch
          %154 = sbr.rel (%p152) target = $region36
        $region35: #{tpu_custom_call.1} parent=27 // pred_region
          %155 = dma.done %s148, 384
        $region36: #{tpu_custom_call.1} parent=27 // pred_fallthru
          _
        %156 = sfence
        %p157 = pneg %p36
        %p158 = pneg %p33
        %s159 = sand.u32 %s49, 1
        %s160 = scalar_lea.sflag [#allocation3], %s159
        %s161 = sand.u32 %s49, 1
        %s162 = smul.addr %s161, 24
        %s163 = scalar_lea.vmem [#allocation6], %s162
        %p164 = pneg %p62
        %p165 = pneg %p59
        %p166 = pneg %p88
        %p167 = pneg %p85
        %s168 = sand.u32 %s75, 1
        %s169 = scalar_lea.sflag [#allocation4], %s168
        %s170 = sand.u32 %s75, 1
        %s171 = smul.addr %s170, 384
        %s172 = scalar_lea.vmem [#allocation7], %s171
        %s173 = smul.u32 4, %s20
        %v174 = vld [vmem:[%s151] sm:$0xff]
        %v175 = vld [vmem:[%s151 + $0x8] sm:$0xff]
        %v176 = vld [vmem:[%s151 + $0x10] sm:$0xff]
        %v177 = vunpack.c.0.s8 %v174
        %v178 = vunpack.c.1.s8 %v174
        %v179 = vunpack.c.2.s8 %v174
        %v180 = vunpack.c.3.s8 %v174
        %v181 = vunpack.c.0.s8 %v175
        %v182 = vunpack.c.1.s8 %v175
        %v183 = vunpack.c.2.s8 %v175
        %v184 = vunpack.c.3.s8 %v175
        %v185 = vunpack.c.0.s8 %v176
        %v186 = vunpack.c.1.s8 %v176
        %v187 = vunpack.c.2.s8 %v176
        %v188 = vunpack.c.3.s8 %v176
        %v189 = vand.u32 %v177, 255
        %v190 = vand.u32 %v178, 255
        %v191 = vand.u32 %v179, 255
        %v192 = vand.u32 %v180, 255
        %v193 = vand.u32 %v181, 255
        %v194 = vand.u32 %v182, 255
        %v195 = vand.u32 %v183, 255
        %v196 = vand.u32 %v184, 255
        %v197 = vand.u32 %v185, 255
        %v198 = vand.u32 %v186, 255
        %v199 = vand.u32 %v187, 255
        %v200 = vand.u32 %v188, 255
        %v201 = vcvt.s32.f32 %v189
        %v202 = vcvt.s32.f32 %v190
        %v203 = vcvt.s32.f32 %v191
        %v204 = vcvt.s32.f32 %v192
        %v205 = vcvt.s32.f32 %v193
        %v206 = vcvt.s32.f32 %v194
        %v207 = vcvt.s32.f32 %v195
        %v208 = vcvt.s32.f32 %v196
        %v209 = vcvt.s32.f32 %v197
        %v210 = vcvt.s32.f32 %v198
        %v211 = vcvt.s32.f32 %v199
        %v212 = vcvt.s32.f32 %v200
        %v213 = vmul.f32 %v201, 0.003921569
        %v214 = vmul.f32 %v202, 0.003921569
        %v215 = vmul.f32 %v203, 0.003921569
        %v216 = vmul.f32 %v204, 0.003921569
        %v217 = vmul.f32 %v205, 0.003921569
        %v218 = vmul.f32 %v206, 0.003921569
        %v219 = vmul.f32 %v207, 0.003921569
        %v220 = vmul.f32 %v208, 0.003921569
        %v221 = vmul.f32 %v209, 0.003921569
        %v222 = vmul.f32 %v210, 0.003921569
        %v223 = vmul.f32 %v211, 0.003921569
        %v224 = vmul.f32 %v212, 0.003921569
        %vm225 = vcmask 785408
        %226 = vst.msk [vmem:[%s172] sm:$0xff] %vm225, %v213
        %227 = vst.msk [vmem:[%s172 + $0x8] sm:$0xff] %vm225, %v214
        %228 = vst.msk [vmem:[%s172 + $0x10] sm:$0xff] %vm225, %v215
        %229 = vst.msk [vmem:[%s172 + $0x18] sm:$0xff] %vm225, %v216
        %230 = vst.msk [vmem:[%s172 + $0x20] sm:$0xff] %vm225, %v217
        %231 = vst.msk [vmem:[%s172 + $0x28] sm:$0xff] %vm225, %v218
        %232 = vst.msk [vmem:[%s172 + $0x30] sm:$0xff] %vm225, %v219
        %233 = vst.msk [vmem:[%s172 + $0x38] sm:$0xff] %vm225, %v220
        %234 = vst.msk [vmem:[%s172 + $0x40] sm:$0xff] %vm225, %v221
        %235 = vst.msk [vmem:[%s172 + $0x48] sm:$0xff] %vm225, %v222
        %236 = vst.msk [vmem:[%s172 + $0x50] sm:$0xff] %vm225, %v223
        %237 = vst.msk [vmem:[%s172 + $0x58] sm:$0xff] %vm225, %v224
        %s238 = sld [smem:[#allocation2]]
        %s239 = sld [smem:[#allocation2 + $0x1]]
        %s240 = sld [smem:[#allocation2 + $0x2]]
        %v241 = vstv %s240
        %v242 = vmul.f32 %v209, %v241
        %v243 = vmul.f32 %v210, %v241
        %v244 = vmul.f32 %v211, %v241
        %v245 = vmul.f32 %v212, %v241
        %v246 = vround.ne.pseudo %v242
        %v247 = vround.ne.pseudo %v243
        %v248 = vround.ne.pseudo %v244
        %v249 = vround.ne.pseudo %v245
        %v250 = vmax.f32 %v246, 0.0
        %v251 = vmax.f32 %v247, 0.0
        %v252 = vmax.f32 %v248, 0.0
        %v253 = vmax.f32 %v249, 0.0
        %v254 = vmin.f32 %v250, 255.0
        %v255 = vmin.f32 %v251, 255.0
        %v256 = vmin.f32 %v252, 255.0
        %v257 = vmin.f32 %v253, 255.0
        %v258 = vmul.f32 %v254, 0.003921569
        %v259 = vmul.f32 %v255, 0.003921569
        %v260 = vmul.f32 %v256, 0.003921569
        %v261 = vmul.f32 %v257, 0.003921569
        %s262 = scalar_lea.vmem %s172, 96 [#allocation7]
        %263 = vst.msk [vmem:[%s262] sm:$0xff] %vm225, %v258
        %264 = vst.msk [vmem:[%s262 + $0x8] sm:$0xff] %vm225, %v259
        %265 = vst.msk [vmem:[%s262 + $0x10] sm:$0xff] %vm225, %v260
        %266 = vst.msk [vmem:[%s262 + $0x18] sm:$0xff] %vm225, %v261
        %v267 = vstv %s239
        %v268 = vmul.f32 %v205, %v267
        %v269 = vmul.f32 %v206, %v267
        %v270 = vmul.f32 %v207, %v267
        %v271 = vmul.f32 %v208, %v267
        %v272 = vround.ne.pseudo %v268
        %v273 = vround.ne.pseudo %v269
        %v274 = vround.ne.pseudo %v270
        %v275 = vround.ne.pseudo %v271
        %v276 = vmax.f32 %v272, 0.0
        %v277 = vmax.f32 %v273, 0.0
        %v278 = vmax.f32 %v274, 0.0
        %v279 = vmax.f32 %v275, 0.0
        %v280 = vmin.f32 %v276, 255.0
        %v281 = vmin.f32 %v277, 255.0
        %v282 = vmin.f32 %v278, 255.0
        %v283 = vmin.f32 %v279, 255.0
        %v284 = vmul.f32 %v280, 0.003921569
        %v285 = vmul.f32 %v281, 0.003921569
        %v286 = vmul.f32 %v282, 0.003921569
        %v287 = vmul.f32 %v283, 0.003921569
        %s288 = scalar_lea.vmem %s172, 128 [#allocation7]
        %289 = vst.msk [vmem:[%s288] sm:$0xff] %vm225, %v284
        %290 = vst.msk [vmem:[%s288 + $0x8] sm:$0xff] %vm225, %v285
        %291 = vst.msk [vmem:[%s288 + $0x10] sm:$0xff] %vm225, %v286
        %292 = vst.msk [vmem:[%s288 + $0x18] sm:$0xff] %vm225, %v287
        %v293 = vstv %s238
        %v294 = vmul.f32 %v201, %v293
        %v295 = vmul.f32 %v202, %v293
        %v296 = vmul.f32 %v203, %v293
        %v297 = vmul.f32 %v204, %v293
        %v298 = vround.ne.pseudo %v294
        %v299 = vround.ne.pseudo %v295
        %v300 = vround.ne.pseudo %v296
        %v301 = vround.ne.pseudo %v297
        %v302 = vmax.f32 %v298, 0.0
        %v303 = vmax.f32 %v299, 0.0
        %v304 = vmax.f32 %v300, 0.0
        %v305 = vmax.f32 %v301, 0.0
        %v306 = vmin.f32 %v302, 255.0
        %v307 = vmin.f32 %v303, 255.0
        %v308 = vmin.f32 %v304, 255.0
        %v309 = vmin.f32 %v305, 255.0
        %v310 = vmul.f32 %v306, 0.003921569
        %v311 = vmul.f32 %v307, 0.003921569
        %v312 = vmul.f32 %v308, 0.003921569
        %v313 = vmul.f32 %v309, 0.003921569
        %s314 = scalar_lea.vmem %s172, 160 [#allocation7]
        %315 = vst.msk [vmem:[%s314] sm:$0xff] %vm225, %v310
        %316 = vst.msk [vmem:[%s314 + $0x8] sm:$0xff] %vm225, %v311
        %317 = vst.msk [vmem:[%s314 + $0x10] sm:$0xff] %vm225, %v312
        %318 = vst.msk [vmem:[%s314 + $0x18] sm:$0xff] %vm225, %v313
        %v319 = vmul.f32 %v201, 1.2
        %v320 = vmul.f32 %v202, 1.2
        %v321 = vmul.f32 %v203, 1.2
        %v322 = vmul.f32 %v204, 1.2
        %v323 = vmul.f32 %v205, 1.2
        %v324 = vmul.f32 %v206, 1.2
        %v325 = vmul.f32 %v207, 1.2
        %v326 = vmul.f32 %v208, 1.2
        %v327 = vmul.f32 %v209, 1.2
        %v328 = vmul.f32 %v210, 1.2
        %v329 = vmul.f32 %v211, 1.2
        %v330 = vmul.f32 %v212, 1.2
        %v331 = vadd.f32 %v319, 10.0
        %v332 = vadd.f32 %v320, 10.0
        %v333 = vadd.f32 %v321, 10.0
        %v334 = vadd.f32 %v322, 10.0
        %v335 = vadd.f32 %v323, 10.0
        %v336 = vadd.f32 %v324, 10.0
        %v337 = vadd.f32 %v325, 10.0
        %v338 = vadd.f32 %v326, 10.0
        %v339 = vadd.f32 %v327, 10.0
        %v340 = vadd.f32 %v328, 10.0
        %v341 = vadd.f32 %v329, 10.0
        %v342 = vadd.f32 %v330, 10.0
        %vm343 = vcmp.gt.f32.partialorder %v331, 255.0
        %vm344 = vcmp.gt.f32.partialorder %v332, 255.0
        %vm345 = vcmp.gt.f32.partialorder %v333, 255.0
        %vm346 = vcmp.gt.f32.partialorder %v334, 255.0
        %vm347 = vcmp.gt.f32.partialorder %v335, 255.0
        %vm348 = vcmp.gt.f32.partialorder %v336, 255.0
        %vm349 = vcmp.gt.f32.partialorder %v337, 255.0
        %vm350 = vcmp.gt.f32.partialorder %v338, 255.0
        %vm351 = vcmp.gt.f32.partialorder %v339, 255.0
        %vm352 = vcmp.gt.f32.partialorder %v340, 255.0
        %vm353 = vcmp.gt.f32.partialorder %v341, 255.0
        %vm354 = vcmp.gt.f32.partialorder %v342, 255.0
        %v355 = vsel %vm343, 255.0, %v331
        %v356 = vsel %vm344, 255.0, %v332
        %v357 = vsel %vm345, 255.0, %v333
        %v358 = vsel %vm346, 255.0, %v334
        %v359 = vsel %vm347, 255.0, %v335
        %v360 = vsel %vm348, 255.0, %v336
        %v361 = vsel %vm349, 255.0, %v337
        %v362 = vsel %vm350, 255.0, %v338
        %v363 = vsel %vm351, 255.0, %v339
        %v364 = vsel %vm352, 255.0, %v340
        %v365 = vsel %vm353, 255.0, %v341
        %v366 = vsel %vm354, 255.0, %v342
        %v367 = vround.ne.pseudo %v355
        %v368 = vround.ne.pseudo %v356
        %v369 = vround.ne.pseudo %v357
        %v370 = vround.ne.pseudo %v358
        %v371 = vround.ne.pseudo %v359
        %v372 = vround.ne.pseudo %v360
        %v373 = vround.ne.pseudo %v361
        %v374 = vround.ne.pseudo %v362
        %v375 = vround.ne.pseudo %v363
        %v376 = vround.ne.pseudo %v364
        %v377 = vround.ne.pseudo %v365
        %v378 = vround.ne.pseudo %v366
        %v379 = vmul.f32 %v367, 0.003921569
        %v380 = vmul.f32 %v368, 0.003921569
        %v381 = vmul.f32 %v369, 0.003921569
        %v382 = vmul.f32 %v370, 0.003921569
        %v383 = vmul.f32 %v371, 0.003921569
        %v384 = vmul.f32 %v372, 0.003921569
        %v385 = vmul.f32 %v373, 0.003921569
        %v386 = vmul.f32 %v374, 0.003921569
        %v387 = vmul.f32 %v375, 0.003921569
        %v388 = vmul.f32 %v376, 0.003921569
        %v389 = vmul.f32 %v377, 0.003921569
        %v390 = vmul.f32 %v378, 0.003921569
        %s391 = scalar_lea.vmem %s172, 192 [#allocation7]
        %392 = vst.msk [vmem:[%s391] sm:$0xff] %vm225, %v379
        %393 = vst.msk [vmem:[%s391 + $0x8] sm:$0xff] %vm225, %v380
        %394 = vst.msk [vmem:[%s391 + $0x10] sm:$0xff] %vm225, %v381
        %395 = vst.msk [vmem:[%s391 + $0x18] sm:$0xff] %vm225, %v382
        %396 = vst.msk [vmem:[%s391 + $0x20] sm:$0xff] %vm225, %v383
        %397 = vst.msk [vmem:[%s391 + $0x28] sm:$0xff] %vm225, %v384
        %398 = vst.msk [vmem:[%s391 + $0x30] sm:$0xff] %vm225, %v385
        %399 = vst.msk [vmem:[%s391 + $0x38] sm:$0xff] %vm225, %v386
        %400 = vst.msk [vmem:[%s391 + $0x40] sm:$0xff] %vm225, %v387
        %401 = vst.msk [vmem:[%s391 + $0x48] sm:$0xff] %vm225, %v388
        %402 = vst.msk [vmem:[%s391 + $0x50] sm:$0xff] %vm225, %v389
        %403 = vst.msk [vmem:[%s391 + $0x58] sm:$0xff] %vm225, %v390
        %v404 = vmul.f32 %v213, %v213
        %v405 = vmul.f32 %v214, %v214
        %v406 = vmul.f32 %v215, %v215
        %v407 = vmul.f32 %v216, %v216
        %v408 = vmul.f32 %v217, %v217
        %v409 = vmul.f32 %v218, %v218
        %v410 = vmul.f32 %v219, %v219
        %v411 = vmul.f32 %v220, %v220
        %v412 = vmul.f32 %v221, %v221
        %v413 = vmul.f32 %v222, %v222
        %v414 = vmul.f32 %v223, %v223
        %v415 = vmul.f32 %v224, %v224
        %v416 = vrsqrt.pop %v213
        %v417 = vmul.f32 %v213, %v416
        %vm418 = vcmp.eq.f32.partialorder %v213, inf
        %v419 = vsel %vm418, %v213, %v417
        %vm420 = vcmp.eq.f32.partialorder %v213, 0.0
        %v421 = vand.u32 %v213, 2147483648
        %v422 = vsel %vm420, %v421, %v419
        %v423 = vrsqrt.pop %v214
        %v424 = vmul.f32 %v214, %v423
        %vm425 = vcmp.eq.f32.partialorder %v214, inf
        %v426 = vsel %vm425, %v214, %v424
        %vm427 = vcmp.eq.f32.partialorder %v214, 0.0
        %v428 = vand.u32 %v214, 2147483648
        %v429 = vsel %vm427, %v428, %v426
        %v430 = vrsqrt.pop %v215
        %v431 = vmul.f32 %v215, %v430
        %vm432 = vcmp.eq.f32.partialorder %v215, inf
        %v433 = vsel %vm432, %v215, %v431
        %vm434 = vcmp.eq.f32.partialorder %v215, 0.0
        %v435 = vand.u32 %v215, 2147483648
        %v436 = vsel %vm434, %v435, %v433
        %v437 = vrsqrt.pop %v216
        %v438 = vmul.f32 %v216, %v437
        %vm439 = vcmp.eq.f32.partialorder %v216, inf
        %v440 = vsel %vm439, %v216, %v438
        %vm441 = vcmp.eq.f32.partialorder %v216, 0.0
        %v442 = vand.u32 %v216, 2147483648
        %v443 = vsel %vm441, %v442, %v440
        %v444 = vrsqrt.pop %v217
        %v445 = vmul.f32 %v217, %v444
        %vm446 = vcmp.eq.f32.partialorder %v217, inf
        %v447 = vsel %vm446, %v217, %v445
        %vm448 = vcmp.eq.f32.partialorder %v217, 0.0
        %v449 = vand.u32 %v217, 2147483648
        %v450 = vsel %vm448, %v449, %v447
        %v451 = vrsqrt.pop %v218
        %v452 = vmul.f32 %v218, %v451
        %vm453 = vcmp.eq.f32.partialorder %v218, inf
        %v454 = vsel %vm453, %v218, %v452
        %vm455 = vcmp.eq.f32.partialorder %v218, 0.0
        %v456 = vand.u32 %v218, 2147483648
        %v457 = vsel %vm455, %v456, %v454
        %v458 = vrsqrt.pop %v219
        %v459 = vmul.f32 %v219, %v458
        %vm460 = vcmp.eq.f32.partialorder %v219, inf
        %v461 = vsel %vm460, %v219, %v459
        %vm462 = vcmp.eq.f32.partialorder %v219, 0.0
        %v463 = vand.u32 %v219, 2147483648
        %v464 = vsel %vm462, %v463, %v461
        %v465 = vrsqrt.pop %v220
        %v466 = vmul.f32 %v220, %v465
        %vm467 = vcmp.eq.f32.partialorder %v220, inf
        %v468 = vsel %vm467, %v220, %v466
        %vm469 = vcmp.eq.f32.partialorder %v220, 0.0
        %v470 = vand.u32 %v220, 2147483648
        %v471 = vsel %vm469, %v470, %v468
        %v472 = vrsqrt.pop %v221
        %v473 = vmul.f32 %v221, %v472
        %vm474 = vcmp.eq.f32.partialorder %v221, inf
        %v475 = vsel %vm474, %v221, %v473
        %vm476 = vcmp.eq.f32.partialorder %v221, 0.0
        %v477 = vand.u32 %v221, 2147483648
        %v478 = vsel %vm476, %v477, %v475
        %v479 = vrsqrt.pop %v222
        %v480 = vmul.f32 %v222, %v479
        %vm481 = vcmp.eq.f32.partialorder %v222, inf
        %v482 = vsel %vm481, %v222, %v480
        %vm483 = vcmp.eq.f32.partialorder %v222, 0.0
        %v484 = vand.u32 %v222, 2147483648
        %v485 = vsel %vm483, %v484, %v482
        %v486 = vrsqrt.pop %v223
        %v487 = vmul.f32 %v223, %v486
        %vm488 = vcmp.eq.f32.partialorder %v223, inf
        %v489 = vsel %vm488, %v223, %v487
        %vm490 = vcmp.eq.f32.partialorder %v223, 0.0
        %v491 = vand.u32 %v223, 2147483648
        %v492 = vsel %vm490, %v491, %v489
        %v493 = vrsqrt.pop %v224
        %v494 = vmul.f32 %v224, %v493
        %vm495 = vcmp.eq.f32.partialorder %v224, inf
        %v496 = vsel %vm495, %v224, %v494
        %vm497 = vcmp.eq.f32.partialorder %v224, 0.0
        %v498 = vand.u32 %v224, 2147483648
        %v499 = vsel %vm497, %v498, %v496
        %v500 = vmul.f32 %v404, %v422
        %v501 = vmul.f32 %v405, %v429
        %v502 = vmul.f32 %v406, %v436
        %v503 = vmul.f32 %v407, %v443
        %v504 = vmul.f32 %v408, %v450
        %v505 = vmul.f32 %v409, %v457
        %v506 = vmul.f32 %v410, %v464
        %v507 = vmul.f32 %v411, %v471
        %v508 = vmul.f32 %v412, %v478
        %v509 = vmul.f32 %v413, %v485
        %v510 = vmul.f32 %v414, %v492
        %v511 = vmul.f32 %v415, %v499
        %v512 = vmul.f32 %v500, 255.0
        %v513 = vmul.f32 %v501, 255.0
        %v514 = vmul.f32 %v502, 255.0
        %v515 = vmul.f32 %v503, 255.0
        %v516 = vmul.f32 %v504, 255.0
        %v517 = vmul.f32 %v505, 255.0
        %v518 = vmul.f32 %v506, 255.0
        %v519 = vmul.f32 %v507, 255.0
        %v520 = vmul.f32 %v508, 255.0
        %v521 = vmul.f32 %v509, 255.0
        %v522 = vmul.f32 %v510, 255.0
        %v523 = vmul.f32 %v511, 255.0
        %v524 = vfloor.f32 %v512
        %v525 = vfloor.f32 %v513
        %v526 = vfloor.f32 %v514
        %v527 = vfloor.f32 %v515
        %v528 = vfloor.f32 %v516
        %v529 = vfloor.f32 %v517
        %v530 = vfloor.f32 %v518
        %v531 = vfloor.f32 %v519
        %v532 = vfloor.f32 %v520
        %v533 = vfloor.f32 %v521
        %v534 = vfloor.f32 %v522
        %v535 = vfloor.f32 %v523
        %v536 = vmul.f32 %v524, 0.003921569
        %v537 = vmul.f32 %v525, 0.003921569
        %v538 = vmul.f32 %v526, 0.003921569
        %v539 = vmul.f32 %v527, 0.003921569
        %v540 = vmul.f32 %v528, 0.003921569
        %v541 = vmul.f32 %v529, 0.003921569
        %v542 = vmul.f32 %v530, 0.003921569
        %v543 = vmul.f32 %v531, 0.003921569
        %v544 = vmul.f32 %v532, 0.003921569
        %v545 = vmul.f32 %v533, 0.003921569
        %v546 = vmul.f32 %v534, 0.003921569
        %v547 = vmul.f32 %v535, 0.003921569
        %s548 = scalar_lea.vmem %s172, 288 [#allocation7]
        %549 = vst.msk [vmem:[%s548] sm:$0xff] %vm225, %v536
        %550 = vst.msk [vmem:[%s548 + $0x8] sm:$0xff] %vm225, %v537
        %551 = vst.msk [vmem:[%s548 + $0x10] sm:$0xff] %vm225, %v538
        %552 = vst.msk [vmem:[%s548 + $0x18] sm:$0xff] %vm225, %v539
        %553 = vst.msk [vmem:[%s548 + $0x20] sm:$0xff] %vm225, %v540
        %554 = vst.msk [vmem:[%s548 + $0x28] sm:$0xff] %vm225, %v541
        %555 = vst.msk [vmem:[%s548 + $0x30] sm:$0xff] %vm225, %v542
        %556 = vst.msk [vmem:[%s548 + $0x38] sm:$0xff] %vm225, %v543
        %557 = vst.msk [vmem:[%s548 + $0x40] sm:$0xff] %vm225, %v544
        %558 = vst.msk [vmem:[%s548 + $0x48] sm:$0xff] %vm225, %v545
        %559 = vst.msk [vmem:[%s548 + $0x50] sm:$0xff] %vm225, %v546
        %560 = vst.msk [vmem:[%s548 + $0x58] sm:$0xff] %vm225, %v547
        %s561 = sand.u32 %s75, 1
        %s562 = scalar_lea.sflag [#allocation4], %s561
        %s563 = sand.u32 %s75, 1
        %s564 = smul.addr %s563, 384
        %s565 = scalar_lea.vmem [#allocation7], %s564
        // Predicated region
        $region37: #{tpu_custom_call.1} parent=27 // pred_check
          %p566 = pneg %p85
        $region38: #{tpu_custom_call.1} parent=27 // pred_check_branch
          %568 = sbr.rel (%p566) target = $region40
        $region39: #{tpu_custom_call.1} parent=27 // pred_region
          #allocation9 [shape = 'u32[6]{0}', space=smem, size = 0x18, scoped, tag = 'DMA stride descriptor']
          %s569 = smul.u32 4, %s20
          %s571 = ssub.s32 6144, 6144
          %572 = vsyncadd %s562, %s571
          %s573 = smul.addr %s569, 128
          %s574 = scalar_lea.hbm %s2, %s573
          %s576 = sshll.u32 1, 14
          %s577 = sxor.u32 4294967295, %s576
          %s580 = sshll.u32 7, 18
          %s581 = sxor.u32 4294967295, %s580
          %s582 = sand.u32 0, %s581
          %s584 = sor.u32 %s582, 0
          %s586 = sshll.u32 3, 24
          %s587 = sxor.u32 4294967295, %s586
          %s588 = sand.u32 %s584, %s587
          %s590 = sor.u32 %s588, 0
          %s591 = sshll.u32 %s565, 4
          %s592 = int_to_ptr.vmem [resolvable:$true] %s591
          %598 = sst [smem:[#allocation9]] 512
          %s599 = scalar_lea.smem [#allocation9], 1
          %600 = sst [smem:[%s599]] 1024
          %s601 = scalar_lea.smem [#allocation9], 2
          %602 = sst [smem:[%s601]] 4
          %s603 = scalar_lea.smem [#allocation9], 3
          %604 = sst [smem:[%s603]] 128
          %s605 = scalar_lea.smem [#allocation9], 4
          %606 = sst [smem:[%s605]] 128
          %s607 = scalar_lea.smem [#allocation9], 5
          %608 = sst [smem:[%s607]] 8
          %610 = dma.general %s592, 6144, %s574, %s562, [#allocation8], [#allocation9], %s590, 0
        $region40: #{tpu_custom_call.1} parent=27 // pred_fallthru
          _
      $region28: #{tpu_custom_call.1} parent=5 // pred_fallthru
        _
      %p611 = scmp.le.s32.totalorder 2, %s15
      // Predicated region
      $region41: #{tpu_custom_call.1} parent=5 // pred_check
        %p612 = pneg %p611
      $region42: #{tpu_custom_call.1} parent=5 // pred_check_branch
        %614 = sbr.rel (%p612) target = $region44
      $region43: #{tpu_custom_call.1} parent=5 // pred_region
        %s615 = ssub.s32 %s15, 2
        // Predicated region
        $region45: #{tpu_custom_call.1} parent=43 // pred_check
          %p616 = pneg %p91
        $region46: #{tpu_custom_call.1} parent=43 // pred_check_branch
          %618 = sbr.rel (%p616) target = $region48
        $region47: #{tpu_custom_call.1} parent=43 // pred_region
          %s619 = sand.u32 %s76, 1
          %s620 = scalar_lea.sflag [#allocation4], %s619
          %s621 = sand.u32 %s76, 1
          %s622 = smul.addr %s621, 384
          %s623 = scalar_lea.vmem [#allocation7], %s622
          %624 = dma.done %s620, 6144
        $region48: #{tpu_custom_call.1} parent=43 // pred_fallthru
          _
      $region44: #{tpu_custom_call.1} parent=5 // pred_fallthru
        _
    $region6: #{tpu_custom_call.1} parent=1 // loop_footer
      %s19 = sadd.s32 1, %s15
    $region7: #{tpu_custom_call.1} parent=1 // loop_footer_branch
      %14 = sbr.rel target = $region3
    $region8: #{tpu_custom_call.1} parent=1 // loop_exit
      _
    %625 = vsyncpa [#allocation3], 1
    %s626 = scalar_lea.sflag [#allocation3], 1
    %627 = vsyncpa %s626, 1
    %628 = vsyncpa [#allocation4], 1
    %s629 = scalar_lea.sflag [#allocation4], 1
    %630 = vsyncpa %s629, 1
    %631 = vsyncpa [#allocation5], 1
    %s632 = scalar_lea.sflag [#allocation5], 1
    %633 = vsyncpa %s632, 1

</llo_original>
